<compile_context>
chip_gen: v5e
topology: v5e:2x2
jax: 0.10.0
libtpu: 0.0.40
codegen_flags: <defaults>
</compile_context>

<pallas_src>
import jax
import jax.numpy as jnp
from jax.experimental import pallas as pl
from jax.experimental.pallas import tpu as pltpu


# ----------------------------------------------------------------------------
# Kernels
# ----------------------------------------------------------------------------
def _sigmoid_kernel(phi_ref, phi_prob_ref):
    # phi_ref / phi_prob_ref: (1, D, T) block of (K, D, T); purely element-wise.
    phi_prob_ref[...] = jax.nn.sigmoid(phi_ref[...])


def _theta_pi_kernel(lam_ref, phi_ref, theta_ref, pi_ref):
    # lam_ref:   (tn, K, T)  -- native (N, K, T) layout, T on lanes
    # phi_ref:   (K,  D, T)  -- full phi, resident across the N grid
    # theta_ref: (tn, K, T)
    # pi_ref:    (tn, D, T)
    lam = lam_ref[...]                                   # (tn, K, T) f32

    # softmax over K (axis=1)  ==  torch.softmax(lambda_, dim=1)
    m = jnp.max(lam, axis=1, keepdims=True)              # (tn, 1, T)
    e = jnp.exp(lam - m)                                 # (tn, K, T)
    denom = jnp.sum(e, axis=1, keepdims=True)            # (tn, 1, T)
    # divide -> EUP reciprocal (exact) + VPU multiply; keeps 1e-5 tolerance.
    theta = e * pl.reciprocal(denom, approx=False)       # (tn, K, T)
    theta_ref[...] = theta

    # sigmoid(phi): recomputed per N tile (EUP-bound, free filler); the HBM
    # copy of phi_prob is written once by the dedicated sigmoid kernel.
    phi_prob = jax.nn.sigmoid(phi_ref[...])              # (K, D, T)

    # pi[n, d, t] = sum_k theta[n, k, t] * phi_prob[k, d, t]
    # K is small, so instead of a starved MXU matmul do K lane-dense VPU
    # broadcast multiply-accumulates (static unroll over K).
    K = phi_prob.shape[0]
    acc = theta[:, 0:1, :] * phi_prob[0:1, :, :]          # (tn, D, T)
    for k in range(1, K):
        acc = acc + theta[:, k:k + 1, :] * phi_prob[k:k + 1, :, :]
    pi_ref[...] = acc


# ----------------------------------------------------------------------------
# Wrapper
# ----------------------------------------------------------------------------
def _pick_n_tile(N, K, D, T, budget_bytes=6 << 20):
    """Largest divisor of N whose per-step f32 working set (lambda + theta + pi
    blocks, double-buffered) stays under `budget_bytes`."""
    bytes_per_row = (2 * K * T + D * T) * 4 * 2           # x2 for double buffering
    max_tn = max(1, budget_bytes // max(bytes_per_row, 1))
    tn = int(min(N, max_tn))
    while N % tn:
        tn -= 1
    return tn


@jax.jit
def aladyn_forward(lambda_, phi):
    """lambda_: (N, K, T) f32, phi: (K, D, T) f32.

    Returns (pi, theta, phi_prob) with PyTorch layouts:
      pi: (N, D, T), theta: (N, K, T), phi_prob: (K, D, T)
    """
    N, K, T = lambda_.shape
    K2, D, T2 = phi.shape
    assert K == K2 and T == T2

    lambda_ = lambda_.astype(jnp.float32)
    phi = phi.astype(jnp.float32)

    # phi_prob = sigmoid(phi), computed directly in the native (K, D, T) layout
    # (no transposes, no round-trip through any other layout).
    phi_prob = pl.pallas_call(
        _sigmoid_kernel,
        out_shape=jax.ShapeDtypeStruct((K, D, T), jnp.float32),
        grid_spec=pltpu.PrefetchScalarGridSpec(
            num_scalar_prefetch=0,
            grid=(K,),
            in_specs=[pl.BlockSpec((1, D, T), lambda k: (k, 0, 0))],
            out_specs=pl.BlockSpec((1, D, T), lambda k: (k, 0, 0)),
        ),
        compiler_params=pltpu.CompilerParams(
            dimension_semantics=("parallel",)),
    )(phi)

    # theta + pi: grid over N tiles only; T stays full-extent in the lane axis.
    # TODO(synk): if T ever grows past a few thousand, add a T grid axis with
    # 128-multiple lane tiles.
    tn = _pick_n_tile(N, K, D, T)
    theta, pi = pl.pallas_call(
        _theta_pi_kernel,
        out_shape=(
            jax.ShapeDtypeStruct((N, K, T), jnp.float32),   # theta
            jax.ShapeDtypeStruct((N, D, T), jnp.float32),   # pi
        ),
        grid_spec=pltpu.PrefetchScalarGridSpec(
            num_scalar_prefetch=0,
            grid=(N // tn,),
            in_specs=[
                pl.BlockSpec((tn, K, T), lambda n: (n, 0, 0)),
                pl.BlockSpec((K, D, T), lambda n: (0, 0, 0)),   # resident in VMEM
            ],
            out_specs=[
                pl.BlockSpec((tn, K, T), lambda n: (n, 0, 0)),
                pl.BlockSpec((tn, D, T), lambda n: (n, 0, 0)),
            ],
        ),
        compiler_params=pltpu.CompilerParams(
            dimension_semantics=("parallel",),        # megacore sharding on v7x
            vmem_limit_bytes=32 << 20),
    )(lambda_, phi)

    return pi, theta, phi_prob


def _reference_forward(lambda_, phi):
    theta = jax.nn.softmax(lambda_, axis=1)
    phi_prob = jax.nn.sigmoid(phi)
    pi = jnp.einsum('nkt,kdt->ndt', theta, phi_prob)
    return pi, theta, phi_prob


if __name__ == "__main__":
    # Small synthetic shapes consistent with the module:
    #   N patients, D diseases, T timepoints, K topics, P genetic covariates.
    N, D, T, K, P = 8, 16, 8, 4, 3

    key = jax.random.PRNGKey(0)
    k_lam, k_phi, k_prev = jax.random.split(key, 3)

    # Deterministic synthetic parameter init (the module's __init__ draws these
    # from GP priors around G@gamma / logit(prevalence); only shapes/dtypes
    # matter for the forward pass).
    prevalence = jax.random.uniform(k_prev, (D,), minval=0.05, maxval=0.3)
    logit_prev = jnp.log(prevalence / (1.0 - prevalence))

    lambda_ = jax.random.normal(k_lam, (N, K, T), dtype=jnp.float32)
    phi = (logit_prev[None, :, None]
           + 0.5 * jax.random.normal(k_phi, (K, D, T), dtype=jnp.float32)
           ).astype(jnp.float32)

    pi, theta, phi_prob = aladyn_forward(lambda_, phi)
    jax.block_until_ready((pi, theta, phi_prob))

    pi_ref, theta_ref, phi_prob_ref = _reference_forward(lambda_, phi)

    assert pi.shape == (N, D, T) and theta.shape == (N, K, T) and phi_prob.shape == (K, D, T)
    assert jnp.allclose(pi, pi_ref, atol=1e-5, rtol=1e-5)
    assert jnp.allclose(theta, theta_ref, atol=1e-5, rtol=1e-5)
    assert jnp.allclose(phi_prob, phi_prob_ref, atol=1e-5, rtol=1e-5)

    # TODO(synk): compute_loss (data-dependent per-(n,d) censoring loop) and
    # compute_gp_prior_loss (matrix inverses) are training-time extras, not
    # part of forward().
    print("KERNEL_OK")
</pallas_src>

<mosaic_0001>
module attributes {stable_mosaic.version = 11 : i64} {
  func.func @_sigmoid_kernel(%arg0: i32, %arg1: memref<1x16x8xf32, #tpu.memory_space<vmem>>, %arg2: memref<1x16x8xf32, #tpu.memory_space<vmem>>) attributes {dimension_semantics = [#tpu.dimension_semantics<parallel>], iteration_bounds = array<i64: 4>, scalar_prefetch = 0 : i64, scratch_operands = 0 : i64, tpu.core_type = #tpu.core_type<tc>, window_params = [{transform_indices = @transform_0, window_bounds = array<i64: 1, 16, 8>}, {transform_indices = @transform_1, window_bounds = array<i64: 1, 16, 8>}]} {
    %c0 = arith.constant 0 : index
    %c0_0 = arith.constant 0 : index
    %c0_1 = arith.constant 0 : index
    %0 = vector.load %arg1[%c0, %c0_0, %c0_1] : memref<1x16x8xf32, #tpu.memory_space<vmem>>, vector<1x16x8xf32>
    %1 = arith.negf %0 : vector<1x16x8xf32>
    %2 = math.exp %1 : vector<1x16x8xf32>
    %cst = arith.constant 1.000000e+00 : f32
    %3 = vector.broadcast %cst : f32 to vector<1x16x8xf32>
    %4 = arith.addf %3, %2 : vector<1x16x8xf32>
    %5 = arith.divf %3, %4 : vector<1x16x8xf32>
    %c0_2 = arith.constant 0 : index
    %c0_3 = arith.constant 0 : index
    %c0_4 = arith.constant 0 : index
    %6 = vector.load %arg2[%c0_2, %c0_3, %c0_4] : memref<1x16x8xf32, #tpu.memory_space<vmem>>, vector<1x16x8xf32>
    tpu.vector_store %arg2[%c0_2, %c0_3, %c0_4], %5 {strides = array<i32>} : memref<1x16x8xf32, #tpu.memory_space<vmem>>, vector<1x16x8xf32>,
    return
  }
  func.func @transform_0(%arg0: i32) -> (i32, i32, i32) {
    %c0_i32 = arith.constant 0 : i32
    %c0_i32_0 = arith.constant 0 : i32
    %c0_i32_1 = arith.constant 0 : i32
    return %arg0, %c0_i32, %c0_i32_0 : i32, i32, i32
  }
  func.func @transform_1(%arg0: i32) -> (i32, i32, i32) {
    %c0_i32 = arith.constant 0 : i32
    %c0_i32_0 = arith.constant 0 : i32
    %c0_i32_1 = arith.constant 0 : i32
    return %arg0, %c0_i32, %c0_i32_0 : i32, i32, i32
  }
}

module attributes {stable_mosaic.version = 11 : i64} {
  func.func @_theta_pi_kernel(%arg0: i32, %arg1: memref<8x4x8xf32, #tpu.memory_space<vmem>>, %arg2: memref<4x16x8xf32, #tpu.memory_space<vmem>>, %arg3: memref<8x4x8xf32, #tpu.memory_space<vmem>>, %arg4: memref<8x16x8xf32, #tpu.memory_space<vmem>>) attributes {dimension_semantics = [#tpu.dimension_semantics<parallel>], iteration_bounds = array<i64: 1>, scalar_prefetch = 0 : i64, scratch_operands = 0 : i64, tpu.core_type = #tpu.core_type<tc>, window_params = [{transform_indices = @transform_0, window_bounds = array<i64: 8, 4, 8>}, {pipeline_mode = #tpu.pipeline_mode<synchronous>, transform_indices = @transform_1, window_bounds = array<i64: 4, 16, 8>}, {transform_indices = @transform_2, window_bounds = array<i64: 8, 4, 8>}, {transform_indices = @transform_3, window_bounds = array<i64: 8, 16, 8>}]} {
    %c0 = arith.constant 0 : index
    %c0_0 = arith.constant 0 : index
    %c0_1 = arith.constant 0 : index
    %0 = vector.load %arg1[%c0, %c0_0, %c0_1] : memref<8x4x8xf32, #tpu.memory_space<vmem>>, vector<8x4x8xf32>
    %cst = arith.constant dense<0xFF800000> : vector<8x8xf32>
    %1 = vector.multi_reduction <maximumf>, %0, %cst [1] : vector<8x4x8xf32> to vector<8x8xf32>
    %2 = vector.shape_cast %1 : vector<8x8xf32> to vector<8x1x8xf32>
    %3 = vector.broadcast %2 : vector<8x1x8xf32> to vector<8x4x8xf32>
    %4 = arith.subf %0, %3 : vector<8x4x8xf32>
    %5 = math.exp %4 : vector<8x4x8xf32>
    %cst_2 = arith.constant dense<0.000000e+00> : vector<8x8xf32>
    %6 = vector.multi_reduction <add>, %5, %cst_2 [1] : vector<8x4x8xf32> to vector<8x8xf32>
    %7 = vector.shape_cast %6 : vector<8x8xf32> to vector<8x1x8xf32>
    %8 = tpu.reciprocal %7 : vector<8x1x8xf32> -> vector<8x1x8xf32>
    %9 = vector.broadcast %8 : vector<8x1x8xf32> to vector<8x4x8xf32>
    %10 = arith.mulf %5, %9 : vector<8x4x8xf32>
    %c0_3 = arith.constant 0 : index
    %c0_4 = arith.constant 0 : index
    %c0_5 = arith.constant 0 : index
    %11 = vector.load %arg3[%c0_3, %c0_4, %c0_5] : memref<8x4x8xf32, #tpu.memory_space<vmem>>, vector<8x4x8xf32>
    tpu.vector_store %arg3[%c0_3, %c0_4, %c0_5], %10 {strides = array<i32>} : memref<8x4x8xf32, #tpu.memory_space<vmem>>, vector<8x4x8xf32>,
    %c0_6 = arith.constant 0 : index
    %c0_7 = arith.constant 0 : index
    %c0_8 = arith.constant 0 : index
    %12 = vector.load %arg2[%c0_6, %c0_7, %c0_8] : memref<4x16x8xf32, #tpu.memory_space<vmem>>, vector<4x16x8xf32>
    %13 = arith.negf %12 : vector<4x16x8xf32>
    %14 = math.exp %13 : vector<4x16x8xf32>
    %cst_9 = arith.constant 1.000000e+00 : f32
    %15 = vector.broadcast %cst_9 : f32 to vector<4x16x8xf32>
    %16 = arith.addf %15, %14 : vector<4x16x8xf32>
    %17 = arith.divf %15, %16 : vector<4x16x8xf32>
    %18 = vector.extract_strided_slice %10 {offsets = [0, 0, 0], sizes = [8, 1, 8], strides = [1, 1, 1]} : vector<8x4x8xf32> to vector<8x1x8xf32>
    %19 = vector.extract_strided_slice %17 {offsets = [0, 0, 0], sizes = [1, 16, 8], strides = [1, 1, 1]} : vector<4x16x8xf32> to vector<1x16x8xf32>
    %20 = vector.broadcast %18 : vector<8x1x8xf32> to vector<8x16x8xf32>
    %21 = vector.broadcast %19 : vector<1x16x8xf32> to vector<8x16x8xf32>
    %22 = arith.mulf %20, %21 : vector<8x16x8xf32>
    %23 = vector.extract_strided_slice %10 {offsets = [0, 1, 0], sizes = [8, 1, 8], strides = [1, 1, 1]} : vector<8x4x8xf32> to vector<8x1x8xf32>
    %24 = vector.extract_strided_slice %17 {offsets = [1, 0, 0], sizes = [1, 16, 8], strides = [1, 1, 1]} : vector<4x16x8xf32> to vector<1x16x8xf32>
    %25 = vector.broadcast %23 : vector<8x1x8xf32> to vector<8x16x8xf32>
    %26 = vector.broadcast %24 : vector<1x16x8xf32> to vector<8x16x8xf32>
    %27 = arith.mulf %25, %26 : vector<8x16x8xf32>
    %28 = arith.addf %22, %27 : vector<8x16x8xf32>
    %29 = vector.extract_strided_slice %10 {offsets = [0, 2, 0], sizes = [8, 1, 8], strides = [1, 1, 1]} : vector<8x4x8xf32> to vector<8x1x8xf32>
    %30 = vector.extract_strided_slice %17 {offsets = [2, 0, 0], sizes = [1, 16, 8], strides = [1, 1, 1]} : vector<4x16x8xf32> to vector<1x16x8xf32>
    %31 = vector.broadcast %29 : vector<8x1x8xf32> to vector<8x16x8xf32>
    %32 = vector.broadcast %30 : vector<1x16x8xf32> to vector<8x16x8xf32>
    %33 = arith.mulf %31, %32 : vector<8x16x8xf32>
    %34 = arith.addf %28, %33 : vector<8x16x8xf32>
    %35 = vector.extract_strided_slice %10 {offsets = [0, 3, 0], sizes = [8, 1, 8], strides = [1, 1, 1]} : vector<8x4x8xf32> to vector<8x1x8xf32>
    %36 = vector.extract_strided_slice %17 {offsets = [3, 0, 0], sizes = [1, 16, 8], strides = [1, 1, 1]} : vector<4x16x8xf32> to vector<1x16x8xf32>
    %37 = vector.broadcast %35 : vector<8x1x8xf32> to vector<8x16x8xf32>
    %38 = vector.broadcast %36 : vector<1x16x8xf32> to vector<8x16x8xf32>
    %39 = arith.mulf %37, %38 : vector<8x16x8xf32>
    %40 = arith.addf %34, %39 : vector<8x16x8xf32>
    %c0_10 = arith.constant 0 : index
    %c0_11 = arith.constant 0 : index
    %c0_12 = arith.constant 0 : index
    %41 = vector.load %arg4[%c0_10, %c0_11, %c0_12] : memref<8x16x8xf32, #tpu.memory_space<vmem>>, vector<8x16x8xf32>
    tpu.vector_store %arg4[%c0_10, %c0_11, %c0_12], %40 {strides = array<i32>} : memref<8x16x8xf32, #tpu.memory_space<vmem>>, vector<8x16x8xf32>,
    return
  }
  func.func @transform_0(%arg0: i32) -> (i32, i32, i32) {
    %c0_i32 = arith.constant 0 : i32
    %c0_i32_0 = arith.constant 0 : i32
    %c0_i32_1 = arith.constant 0 : i32
    return %arg0, %c0_i32, %c0_i32_0 : i32, i32, i32
  }
  func.func @transform_1(%arg0: i32) -> (i32, i32, i32) {
    %c0_i32 = arith.constant 0 : i32
    %c0_i32_0 = arith.constant 0 : i32
    %c0_i32_1 = arith.constant 0 : i32
    %c0_i32_2 = arith.constant 0 : i32
    return %c0_i32, %c0_i32_0, %c0_i32_1 : i32, i32, i32
  }
  func.func @transform_2(%arg0: i32) -> (i32, i32, i32) {
    %c0_i32 = arith.constant 0 : i32
    %c0_i32_0 = arith.constant 0 : i32
    %c0_i32_1 = arith.constant 0 : i32
    return %arg0, %c0_i32, %c0_i32_0 : i32, i32, i32
  }
  func.func @transform_3(%arg0: i32) -> (i32, i32, i32) {
    %c0_i32 = arith.constant 0 : i32
    %c0_i32_0 = arith.constant 0 : i32
    %c0_i32_1 = arith.constant 0 : i32
    return %arg0, %c0_i32, %c0_i32_0 : i32, i32, i32
  }
}

</mosaic_0001>

<llo_original>
// kernel: aladyn_forward.2
$region0: #{aladyn_forward.2}
  #allocation0 [shape = 'u32[]', space=smem, size = 0x4, offset = 0x4, fixed_abs, tag = 'smem constant byte address 0x4 - core index']
  #allocation1 [shape = 'u32[72,128]{1,0:T(1,128)}', space=vmem, size = 0x9000, scoped, tag = 'internal scratch']
  %s0 = inlined_call_operand.vmem [shape: f32[4,16,8], index: 0, kind: input, shape index: {}]
  %s1 = inlined_call_operand.vmem [shape: f32[4,16,8], index: 1, kind: output, shape index: {}]
  %s2 = sld [smem:[#allocation0]]
  $region37: #{aladyn_forward.2} parent=0
    _
  %s4 = ssub.s32 1, %s2
  %s5 = scalar_select 0, %s4, %s2
  loop: start=0, step=1, limit=6
  $region2: #{aladyn_forward.2} parent=0 // loop_pre_header
    _
  $region3: #{aladyn_forward.2} parent=0 // loop_header
    %s7 = sphi 0, %s11
    %p8 = scmp.ge.s32.totalorder %s7, 6
    %s17 = sphi 0, %s19
    %s20 = sphi 0, %s17
    %s21 = sphi 0, %s20
    %s37 = sphi 0, %s21
    %s43 = sphi 0, %s45
    %s46 = sphi 0, %s43
    %s47 = sphi 0, %s46
    %s63 = sphi 0, %s47
  $region4: #{aladyn_forward.2} parent=0 // loop_header_branch
    %10 = sbr.rel (%p8) target = $region8
  $region5: #{aladyn_forward.2} parent=0 // loop_body
    %s12 = ssub.s32 %s7, 1
    %s13 = ssub.s32 %s7, 2
    %s14 = sadd.s32 %s7, 1
    %s15 = ssub.s32 %s7, %s14
    %p16 = scmp.eq.s32.totalorder %s15, 0
    %s18 = sadd.s32 %s17, 1
    %s19 = scalar_select %p16, %s17, %s18
    %p22 = pneg %p16
    %p23 = scmp.eq.s32.totalorder %s7, 3
    %p24 = por %p22, %p23
    %p25 = scmp.ne.s32.totalorder %s17, %s20
    %p26 = scmp.eq.s32.totalorder %s7, 0
    %p27 = por %p25, %p26
    %p28 = scmp.ne.s32.totalorder %s17, %s20
    %p29 = scmp.eq.s32.totalorder %s12, 3
    %p30 = por %p28, %p29
    %p31 = scmp.ne.s32.totalorder %s20, %s21
    %p32 = scmp.eq.s32.totalorder %s12, 0
    %p33 = por %p31, %p32
    %p34 = scmp.ne.s32.totalorder %s20, %s21
    %p35 = scmp.eq.s32.totalorder %s13, 3
    %p36 = por %p34, %p35
    %p38 = scmp.ne.s32.totalorder %s21, %s37
    %p39 = scmp.eq.s32.totalorder %s13, 0
    %p40 = por %p38, %p39
    %s41 = ssub.s32 %s7, %s14
    %p42 = scmp.eq.s32.totalorder %s41, 0
    %s44 = sadd.s32 %s43, 1
    %s45 = scalar_select %p42, %s43, %s44
    %p48 = pneg %p42
    %p49 = scmp.eq.s32.totalorder %s7, 3
    %p50 = por %p48, %p49
    %p51 = scmp.ne.s32.totalorder %s43, %s46
    %p52 = scmp.eq.s32.totalorder %s7, 0
    %p53 = por %p51, %p52
    %p54 = scmp.ne.s32.totalorder %s43, %s46
    %p55 = scmp.eq.s32.totalorder %s12, 3
    %p56 = por %p54, %p55
    %p57 = scmp.ne.s32.totalorder %s46, %s47
    %p58 = scmp.eq.s32.totalorder %s12, 0
    %p59 = por %p57, %p58
    %p60 = scmp.ne.s32.totalorder %s46, %s47
    %p61 = scmp.eq.s32.totalorder %s13, 3
    %p62 = por %p60, %p61
    %p64 = scmp.ne.s32.totalorder %s47, %s63
    %p65 = scmp.eq.s32.totalorder %s13, 0
    %p66 = por %p64, %p65
    %p67 = scmp.le.s32.totalorder 1, %s7
    %p68 = scmp.lt.s32.totalorder %s7, 5
    %p69 = pnand %p67, %p68
    %p70 = pneg %p69
    // Predicated region
    $region9: #{aladyn_forward.2} parent=5 // pred_check
      _
    $region10: #{aladyn_forward.2} parent=5 // pred_check_branch
      %72 = sbr.rel (%p69) target = $region12
    $region11: #{aladyn_forward.2} parent=5 // pred_region
      %s73 = ssub.s32 %s7, 1
    $region12: #{aladyn_forward.2} parent=5 // pred_fallthru
      _
    %p74 = scmp.lt.s32.totalorder %s7, 4
    // Predicated region
    $region13: #{aladyn_forward.2} parent=5 // pred_check
      %p75 = pneg %p74
    $region14: #{aladyn_forward.2} parent=5 // pred_check_branch
      %77 = sbr.rel (%p75) target = $region16
    $region15: #{aladyn_forward.2} parent=5 // pred_region
      // Predicated region
      $region17: #{aladyn_forward.2} parent=15 // pred_check
        %p78 = pneg %p27
      $region18: #{aladyn_forward.2} parent=15 // pred_check_branch
        %80 = sbr.rel (%p78) target = $region20
      $region19: #{aladyn_forward.2} parent=15 // pred_region
        %p81 = scmp.lt.s32.totalorder %s7, 3
        %s82 = scalar_select %p81, %s7, 3
        %s83 = smul.addr %s82, 2
        %s84 = smul.addr %s83, 8
        %s85 = scalar_lea.vmem %s0, %s84
      $region20: #{aladyn_forward.2} parent=15 // pred_fallthru
        _
    $region16: #{aladyn_forward.2} parent=5 // pred_fallthru
      _
    %p86 = scmp.le.s32.totalorder 1, %s7
    %p87 = scmp.lt.s32.totalorder %s7, 5
    %p88 = pnand %p86, %p87
    %p89 = pneg %p88
    // Predicated region
    $region21: #{aladyn_forward.2} parent=5 // pred_check
      _
    $region22: #{aladyn_forward.2} parent=5 // pred_check_branch
      %91 = sbr.rel (%p88) target = $region24
    $region23: #{aladyn_forward.2} parent=5 // pred_region
      %s92 = ssub.s32 %s7, 1
      %p93 = scmp.lt.s32.totalorder %s12, 3
      %s94 = scalar_select %p93, %s12, 3
      %s95 = smul.addr %s94, 2
      %s96 = smul.addr %s95, 8
      %s97 = scalar_lea.vmem %s0, %s96
      %p98 = pneg %p33
      %p99 = pneg %p30
      %p100 = pneg %p59
      %p101 = pneg %p56
      %p102 = scmp.lt.s32.totalorder %s12, 3
      %s103 = scalar_select %p102, %s12, 3
      %s104 = smul.addr %s103, 2
      %s105 = smul.addr %s104, 8
      %s106 = scalar_lea.vmem %s1, %s105
      %p107 = scmp.lt.s32.totalorder %s12, 3
      %s108 = scalar_select %p107, %s12, 3
      %s109 = smul.addr %s108, 2
      %s110 = smul.addr %s109, 8
      %s111 = scalar_lea.vmem %s0, %s110
      %p112 = scmp.lt.s32.totalorder %s12, 3
      %s113 = scalar_select %p112, %s12, 3
      %s114 = smul.addr %s113, 2
      %s115 = smul.addr %s114, 8
      %s116 = scalar_lea.vmem %s1, %s115
      %v117 = vld [vmem:[%s111] sm:$0xff]
      %v118 = vld [vmem:[%s111 + $0x8] sm:$0xff]
      %v119 = vxor.u32 %v117, 2147483648
      %v120 = vxor.u32 %v118, 2147483648
      %v121 = vmul.f32 %v119, 1.442695
      %v122 = vpow.pop %v121
      %v123 = vmul.f32 %v120, 1.442695
      %v124 = vpow.pop %v123
      %v125 = vadd.f32 %v122, 1.0
      %v126 = vadd.f32 %v124, 1.0
      %v127 = vrcp.pop %v125
      %v128 = vmul.f32 %v125, %v127
      %v129 = vsub.f32 1.0, %v128
      %v130 = vmul.f32 %v127, %v129
      %v131 = vadd.f32 %v127, %v130
      %vm132 = vweird.f32 %v125
      %vm133 = vweird.f32 %v127
      %vm134 = vmor %vm132, %vm133
      %v135 = vsel %vm134, %v127, %v131
      %v136 = vand.u32 2147483647, %v125
      %vm137 = vcmp.eq.f32.partialorder %v136, 8.507059e+37
      %v138 = vand.u32 %v125, 2147483648
      %v139 = vor.u32 1.1754944e-38, %v138
      %v140 = vsel %vm137, %v139, %v135
      %v141 = vmul.f32 1.0, %v140
      %v142 = vrcp.pop %v126
      %v143 = vmul.f32 %v126, %v142
      %v144 = vsub.f32 1.0, %v143
      %v145 = vmul.f32 %v142, %v144
      %v146 = vadd.f32 %v142, %v145
      %vm147 = vweird.f32 %v126
      %vm148 = vweird.f32 %v142
      %vm149 = vmor %vm147, %vm148
      %v150 = vsel %vm149, %v142, %v146
      %v151 = vand.u32 2147483647, %v126
      %vm152 = vcmp.eq.f32.partialorder %v151, 8.507059e+37
      %v153 = vand.u32 %v126, 2147483648
      %v154 = vor.u32 1.1754944e-38, %v153
      %v155 = vsel %vm152, %v154, %v150
      %v156 = vmul.f32 1.0, %v155
      %vm157 = vcmask 64512
      %158 = vst.msk [vmem:[%s116] sm:$0xff] %vm157, %v141
      %159 = vst.msk [vmem:[%s116 + $0x8] sm:$0xff] %vm157, %v156
      %p160 = scmp.lt.s32.totalorder %s12, 3
      %s161 = scalar_select %p160, %s12, 3
      %s162 = smul.addr %s161, 2
      %s163 = smul.addr %s162, 8
      %s164 = scalar_lea.vmem %s1, %s163
      // Predicated region
      $region25: #{aladyn_forward.2} parent=23 // pred_check
        %p165 = pneg %p56
      $region26: #{aladyn_forward.2} parent=23 // pred_check_branch
        %167 = sbr.rel (%p165) target = $region28
      $region27: #{aladyn_forward.2} parent=23 // pred_region
        _
      $region28: #{aladyn_forward.2} parent=23 // pred_fallthru
        _
    $region24: #{aladyn_forward.2} parent=5 // pred_fallthru
      _
    %p168 = scmp.le.s32.totalorder 2, %s7
    // Predicated region
    $region29: #{aladyn_forward.2} parent=5 // pred_check
      %p169 = pneg %p168
    $region30: #{aladyn_forward.2} parent=5 // pred_check_branch
      %171 = sbr.rel (%p169) target = $region32
    $region31: #{aladyn_forward.2} parent=5 // pred_region
      %s172 = ssub.s32 %s7, 2
      // Predicated region
      $region33: #{aladyn_forward.2} parent=31 // pred_check
        %p173 = pneg %p62
      $region34: #{aladyn_forward.2} parent=31 // pred_check_branch
        %175 = sbr.rel (%p173) target = $region36
      $region35: #{aladyn_forward.2} parent=31 // pred_region
        %p176 = scmp.lt.s32.totalorder %s13, 3
        %s177 = scalar_select %p176, %s13, 3
        %s178 = smul.addr %s177, 2
        %s179 = smul.addr %s178, 8
        %s180 = scalar_lea.vmem %s1, %s179
      $region36: #{aladyn_forward.2} parent=31 // pred_fallthru
        _
    $region32: #{aladyn_forward.2} parent=5 // pred_fallthru
      _
  $region6: #{aladyn_forward.2} parent=0 // loop_footer
    %s11 = sadd.s32 1, %s7
  $region7: #{aladyn_forward.2} parent=0 // loop_footer_branch
    %6 = sbr.rel target = $region3
  $region8: #{aladyn_forward.2} parent=0 // loop_exit
    _

// kernel: aladyn_forward.3
$region0: #{aladyn_forward.3}
  #allocation0 [shape = 'u32[]', space=smem, size = 0x4, offset = 0x4, fixed_abs, tag = 'smem constant byte address 0x4 - core index']
  #allocation1 [shape = 'u32[72,128]{1,0:T(1,128)}', space=vmem, size = 0x9000, scoped, tag = 'internal scratch']
  %s0 = inlined_call_operand.vmem [shape: f32[8,4,8], index: 0, kind: input, shape index: {}]
  %s1 = inlined_call_operand.vmem [shape: f32[4,16,8], index: 1, kind: input, shape index: {}]
  %s2 = inlined_call_operand.hbm [shape: f32[8,4,8], index: 2, kind: output, shape index: {0}]
  %s3 = inlined_call_operand.vmem [shape: f32[8,16,8], index: 3, kind: output, shape index: {1}]
  %4 = xla_tuple %s2, %s3
  %s5 = sld [smem:[#allocation0]]
  $region26: #{aladyn_forward.3} parent=0
    _
  %s7 = ssub.s32 1, %s5
  %s8 = scalar_select 0, %s7, %s5
  $region1: #{aladyn_forward.3} parent=0
    #allocation2 [shape = 'u8[16384]{0}', space=vmem, size = 0x4000, scoped, tag = 'output window, operand 0, single buffered']
    #allocation3 [shape = 's32[1]{0}', space=sflag, size = 0x4, scoped, tag = 'scoped memory for aladyn_forward.3']
    %9 = vsyncpa [#allocation3], 0
    // Predicated region
    $region2: #{aladyn_forward.3} parent=1 // pred_check
      _
    $region3: #{aladyn_forward.3} parent=1 // pred_check_branch
      %11 = sbr.rel (0) target = $region5
    $region4: #{aladyn_forward.3} parent=1 // pred_region
      _
    $region5: #{aladyn_forward.3} parent=1 // pred_fallthru
      _
    // Predicated region
    $region6: #{aladyn_forward.3} parent=1 // pred_check
      _
    $region7: #{aladyn_forward.3} parent=1 // pred_check_branch
      %13 = sbr.rel (0) target = $region9
    $region8: #{aladyn_forward.3} parent=1 // pred_region
      _
    $region9: #{aladyn_forward.3} parent=1 // pred_fallthru
      _
    %v14 = vld [vmem:[%s0] sm:$0xf]
    %v15 = vld [vmem:[%s0 + $0x4] sm:$0xf]
    %v16 = vld [vmem:[%s0 + $0x8] sm:$0xf]
    %v17 = vld [vmem:[%s0 + $0xc] sm:$0xf]
    %v18 = vld [vmem:[%s0 + $0x10] sm:$0xf]
    %v19 = vld [vmem:[%s0 + $0x14] sm:$0xf]
    %v20 = vld [vmem:[%s0 + $0x18] sm:$0xf]
    %v21 = vld [vmem:[%s0 + $0x1c] sm:$0xf]
    %vm22 = vcmask 60416
    %v23 = vsel %vm22, %v14, -inf
    %v24 = vrot.slane %v23, 4
    %v25 = vmax.f32 %v23, %v24
    %v26 = vrot.slane %v25, 2
    %v27 = vmax.f32 %v25, %v26
    %v28 = vrot.slane %v27, 1
    %v29 = vmax.f32 %v27, %v28
    %v30 = vsel %vm22, %v15, -inf
    %v31 = vrot.slane %v30, 4
    %v32 = vmax.f32 %v30, %v31
    %v33 = vrot.slane %v32, 2
    %v34 = vmax.f32 %v32, %v33
    %v35 = vrot.slane %v34, 1
    %v36 = vmax.f32 %v34, %v35
    %v37 = vsel %vm22, %v16, -inf
    %v38 = vrot.slane %v37, 4
    %v39 = vmax.f32 %v37, %v38
    %v40 = vrot.slane %v39, 2
    %v41 = vmax.f32 %v39, %v40
    %v42 = vrot.slane %v41, 1
    %v43 = vmax.f32 %v41, %v42
    %v44 = vsel %vm22, %v17, -inf
    %v45 = vrot.slane %v44, 4
    %v46 = vmax.f32 %v44, %v45
    %v47 = vrot.slane %v46, 2
    %v48 = vmax.f32 %v46, %v47
    %v49 = vrot.slane %v48, 1
    %v50 = vmax.f32 %v48, %v49
    %v51 = vsel %vm22, %v18, -inf
    %v52 = vrot.slane %v51, 4
    %v53 = vmax.f32 %v51, %v52
    %v54 = vrot.slane %v53, 2
    %v55 = vmax.f32 %v53, %v54
    %v56 = vrot.slane %v55, 1
    %v57 = vmax.f32 %v55, %v56
    %v58 = vsel %vm22, %v19, -inf
    %v59 = vrot.slane %v58, 4
    %v60 = vmax.f32 %v58, %v59
    %v61 = vrot.slane %v60, 2
    %v62 = vmax.f32 %v60, %v61
    %v63 = vrot.slane %v62, 1
    %v64 = vmax.f32 %v62, %v63
    %v65 = vsel %vm22, %v20, -inf
    %v66 = vrot.slane %v65, 4
    %v67 = vmax.f32 %v65, %v66
    %v68 = vrot.slane %v67, 2
    %v69 = vmax.f32 %v67, %v68
    %v70 = vrot.slane %v69, 1
    %v71 = vmax.f32 %v69, %v70
    %v72 = vsel %vm22, %v21, -inf
    %v73 = vrot.slane %v72, 4
    %v74 = vmax.f32 %v72, %v73
    %v75 = vrot.slane %v74, 2
    %v76 = vmax.f32 %v74, %v75
    %v77 = vrot.slane %v76, 1
    %v78 = vmax.f32 %v76, %v77
    %v79 = vsub.f32 %v14, %v29
    %v80 = vsub.f32 %v15, %v36
    %v81 = vsub.f32 %v16, %v43
    %v82 = vsub.f32 %v17, %v50
    %v83 = vsub.f32 %v18, %v57
    %v84 = vsub.f32 %v19, %v64
    %v85 = vsub.f32 %v20, %v71
    %v86 = vsub.f32 %v21, %v78
    %v87 = vmul.f32 %v79, 1.442695
    %v88 = vpow.pop %v87
    %v89 = vmul.f32 %v80, 1.442695
    %v90 = vpow.pop %v89
    %v91 = vmul.f32 %v81, 1.442695
    %v92 = vpow.pop %v91
    %v93 = vmul.f32 %v82, 1.442695
    %v94 = vpow.pop %v93
    %v95 = vmul.f32 %v83, 1.442695
    %v96 = vpow.pop %v95
    %v97 = vmul.f32 %v84, 1.442695
    %v98 = vpow.pop %v97
    %v99 = vmul.f32 %v85, 1.442695
    %v100 = vpow.pop %v99
    %v101 = vmul.f32 %v86, 1.442695
    %v102 = vpow.pop %v101
    %v103 = vsel %vm22, %v88, 0.0
    %v104 = vrot.slane %v103, 4
    %v105 = vadd.f32 %v103, %v104
    %v106 = vrot.slane %v105, 2
    %v107 = vadd.f32 %v105, %v106
    %v108 = vrot.slane %v107, 1
    %v109 = vadd.f32 %v107, %v108
    %v110 = vsel %vm22, %v90, 0.0
    %v111 = vrot.slane %v110, 4
    %v112 = vadd.f32 %v110, %v111
    %v113 = vrot.slane %v112, 2
    %v114 = vadd.f32 %v112, %v113
    %v115 = vrot.slane %v114, 1
    %v116 = vadd.f32 %v114, %v115
    %v117 = vsel %vm22, %v92, 0.0
    %v118 = vrot.slane %v117, 4
    %v119 = vadd.f32 %v117, %v118
    %v120 = vrot.slane %v119, 2
    %v121 = vadd.f32 %v119, %v120
    %v122 = vrot.slane %v121, 1
    %v123 = vadd.f32 %v121, %v122
    %v124 = vsel %vm22, %v94, 0.0
    %v125 = vrot.slane %v124, 4
    %v126 = vadd.f32 %v124, %v125
    %v127 = vrot.slane %v126, 2
    %v128 = vadd.f32 %v126, %v127
    %v129 = vrot.slane %v128, 1
    %v130 = vadd.f32 %v128, %v129
    %v131 = vsel %vm22, %v96, 0.0
    %v132 = vrot.slane %v131, 4
    %v133 = vadd.f32 %v131, %v132
    %v134 = vrot.slane %v133, 2
    %v135 = vadd.f32 %v133, %v134
    %v136 = vrot.slane %v135, 1
    %v137 = vadd.f32 %v135, %v136
    %v138 = vsel %vm22, %v98, 0.0
    %v139 = vrot.slane %v138, 4
    %v140 = vadd.f32 %v138, %v139
    %v141 = vrot.slane %v140, 2
    %v142 = vadd.f32 %v140, %v141
    %v143 = vrot.slane %v142, 1
    %v144 = vadd.f32 %v142, %v143
    %v145 = vsel %vm22, %v100, 0.0
    %v146 = vrot.slane %v145, 4
    %v147 = vadd.f32 %v145, %v146
    %v148 = vrot.slane %v147, 2
    %v149 = vadd.f32 %v147, %v148
    %v150 = vrot.slane %v149, 1
    %v151 = vadd.f32 %v149, %v150
    %v152 = vsel %vm22, %v102, 0.0
    %v153 = vrot.slane %v152, 4
    %v154 = vadd.f32 %v152, %v153
    %v155 = vrot.slane %v154, 2
    %v156 = vadd.f32 %v154, %v155
    %v157 = vrot.slane %v156, 1
    %v158 = vadd.f32 %v156, %v157
    %v159 = vrcp.pop %v109
    %v160 = vmul.f32 %v109, %v159
    %v161 = vsub.f32 1.0, %v160
    %v162 = vmul.f32 %v159, %v161
    %v163 = vadd.f32 %v159, %v162
    %vm164 = vweird.f32 %v109
    %vm165 = vweird.f32 %v159
    %vm166 = vmor %vm164, %vm165
    %v167 = vsel %vm166, %v159, %v163
    %v168 = vand.u32 2147483647, %v109
    %vm169 = vcmp.eq.f32.partialorder %v168, 8.507059e+37
    %v170 = vand.u32 %v109, 2147483648
    %v171 = vor.u32 1.1754944e-38, %v170
    %v172 = vsel %vm169, %v171, %v167
    %v173 = vrcp.pop %v116
    %v174 = vmul.f32 %v116, %v173
    %v175 = vsub.f32 1.0, %v174
    %v176 = vmul.f32 %v173, %v175
    %v177 = vadd.f32 %v173, %v176
    %vm178 = vweird.f32 %v116
    %vm179 = vweird.f32 %v173
    %vm180 = vmor %vm178, %vm179
    %v181 = vsel %vm180, %v173, %v177
    %v182 = vand.u32 2147483647, %v116
    %vm183 = vcmp.eq.f32.partialorder %v182, 8.507059e+37
    %v184 = vand.u32 %v116, 2147483648
    %v185 = vor.u32 1.1754944e-38, %v184
    %v186 = vsel %vm183, %v185, %v181
    %v187 = vrcp.pop %v123
    %v188 = vmul.f32 %v123, %v187
    %v189 = vsub.f32 1.0, %v188
    %v190 = vmul.f32 %v187, %v189
    %v191 = vadd.f32 %v187, %v190
    %vm192 = vweird.f32 %v123
    %vm193 = vweird.f32 %v187
    %vm194 = vmor %vm192, %vm193
    %v195 = vsel %vm194, %v187, %v191
    %v196 = vand.u32 2147483647, %v123
    %vm197 = vcmp.eq.f32.partialorder %v196, 8.507059e+37
    %v198 = vand.u32 %v123, 2147483648
    %v199 = vor.u32 1.1754944e-38, %v198
    %v200 = vsel %vm197, %v199, %v195
    %v201 = vrcp.pop %v130
    %v202 = vmul.f32 %v130, %v201
    %v203 = vsub.f32 1.0, %v202
    %v204 = vmul.f32 %v201, %v203
    %v205 = vadd.f32 %v201, %v204
    %vm206 = vweird.f32 %v130
    %vm207 = vweird.f32 %v201
    %vm208 = vmor %vm206, %vm207
    %v209 = vsel %vm208, %v201, %v205
    %v210 = vand.u32 2147483647, %v130
    %vm211 = vcmp.eq.f32.partialorder %v210, 8.507059e+37
    %v212 = vand.u32 %v130, 2147483648
    %v213 = vor.u32 1.1754944e-38, %v212
    %v214 = vsel %vm211, %v213, %v209
    %v215 = vrcp.pop %v137
    %v216 = vmul.f32 %v137, %v215
    %v217 = vsub.f32 1.0, %v216
    %v218 = vmul.f32 %v215, %v217
    %v219 = vadd.f32 %v215, %v218
    %vm220 = vweird.f32 %v137
    %vm221 = vweird.f32 %v215
    %vm222 = vmor %vm220, %vm221
    %v223 = vsel %vm222, %v215, %v219
    %v224 = vand.u32 2147483647, %v137
    %vm225 = vcmp.eq.f32.partialorder %v224, 8.507059e+37
    %v226 = vand.u32 %v137, 2147483648
    %v227 = vor.u32 1.1754944e-38, %v226
    %v228 = vsel %vm225, %v227, %v223
    %v229 = vrcp.pop %v144
    %v230 = vmul.f32 %v144, %v229
    %v231 = vsub.f32 1.0, %v230
    %v232 = vmul.f32 %v229, %v231
    %v233 = vadd.f32 %v229, %v232
    %vm234 = vweird.f32 %v144
    %vm235 = vweird.f32 %v229
    %vm236 = vmor %vm234, %vm235
    %v237 = vsel %vm236, %v229, %v233
    %v238 = vand.u32 2147483647, %v144
    %vm239 = vcmp.eq.f32.partialorder %v238, 8.507059e+37
    %v240 = vand.u32 %v144, 2147483648
    %v241 = vor.u32 1.1754944e-38, %v240
    %v242 = vsel %vm239, %v241, %v237
    %v243 = vrcp.pop %v151
    %v244 = vmul.f32 %v151, %v243
    %v245 = vsub.f32 1.0, %v244
    %v246 = vmul.f32 %v243, %v245
    %v247 = vadd.f32 %v243, %v246
    %vm248 = vweird.f32 %v151
    %vm249 = vweird.f32 %v243
    %vm250 = vmor %vm248, %vm249
    %v251 = vsel %vm250, %v243, %v247
    %v252 = vand.u32 2147483647, %v151
    %vm253 = vcmp.eq.f32.partialorder %v252, 8.507059e+37
    %v254 = vand.u32 %v151, 2147483648
    %v255 = vor.u32 1.1754944e-38, %v254
    %v256 = vsel %vm253, %v255, %v251
    %v257 = vrcp.pop %v158
    %v258 = vmul.f32 %v158, %v257
    %v259 = vsub.f32 1.0, %v258
    %v260 = vmul.f32 %v257, %v259
    %v261 = vadd.f32 %v257, %v260
    %vm262 = vweird.f32 %v158
    %vm263 = vweird.f32 %v257
    %vm264 = vmor %vm262, %vm263
    %v265 = vsel %vm264, %v257, %v261
    %v266 = vand.u32 2147483647, %v158
    %vm267 = vcmp.eq.f32.partialorder %v266, 8.507059e+37
    %v268 = vand.u32 %v158, 2147483648
    %v269 = vor.u32 1.1754944e-38, %v268
    %v270 = vsel %vm267, %v269, %v265
    %v271 = vmul.f32 %v88, %v172
    %v272 = vmul.f32 %v90, %v186
    %v273 = vmul.f32 %v92, %v200
    %v274 = vmul.f32 %v94, %v214
    %v275 = vmul.f32 %v96, %v228
    %v276 = vmul.f32 %v98, %v242
    %v277 = vmul.f32 %v100, %v256
    %v278 = vmul.f32 %v102, %v270
    %279 = vst.msk [vmem:[#allocation2] sm:$0xf] %vm22, %v271
    %280 = vst.msk [vmem:[#allocation2 + $0x4] sm:$0xf] %vm22, %v272
    %281 = vst.msk [vmem:[#allocation2 + $0x8] sm:$0xf] %vm22, %v273
    %282 = vst.msk [vmem:[#allocation2 + $0xc] sm:$0xf] %vm22, %v274
    %283 = vst.msk [vmem:[#allocation2 + $0x10] sm:$0xf] %vm22, %v275
    %284 = vst.msk [vmem:[#allocation2 + $0x14] sm:$0xf] %vm22, %v276
    %285 = vst.msk [vmem:[#allocation2 + $0x18] sm:$0xf] %vm22, %v277
    %286 = vst.msk [vmem:[#allocation2 + $0x1c] sm:$0xf] %vm22, %v278
    %v287 = vld [vmem:[%s1] sm:$0xff]
    %v288 = vld [vmem:[%s1 + $0x8] sm:$0xff]
    %v289 = vld [vmem:[%s1 + $0x10] sm:$0xff]
    %v290 = vld [vmem:[%s1 + $0x18] sm:$0xff]
    %v291 = vld [vmem:[%s1 + $0x20] sm:$0xff]
    %v292 = vld [vmem:[%s1 + $0x28] sm:$0xff]
    %v293 = vld [vmem:[%s1 + $0x30] sm:$0xff]
    %v294 = vld [vmem:[%s1 + $0x38] sm:$0xff]
    %v295 = vxor.u32 %v287, 2147483648
    %v296 = vxor.u32 %v288, 2147483648
    %v297 = vxor.u32 %v289, 2147483648
    %v298 = vxor.u32 %v290, 2147483648
    %v299 = vxor.u32 %v291, 2147483648
    %v300 = vxor.u32 %v292, 2147483648
    %v301 = vxor.u32 %v293, 2147483648
    %v302 = vxor.u32 %v294, 2147483648
    %v303 = vmul.f32 %v295, 1.442695
    %v304 = vpow.pop %v303
    %v305 = vmul.f32 %v296, 1.442695
    %v306 = vpow.pop %v305
    %v307 = vmul.f32 %v297, 1.442695
    %v308 = vpow.pop %v307
    %v309 = vmul.f32 %v298, 1.442695
    %v310 = vpow.pop %v309
    %v311 = vmul.f32 %v299, 1.442695
    %v312 = vpow.pop %v311
    %v313 = vmul.f32 %v300, 1.442695
    %v314 = vpow.pop %v313
    %v315 = vmul.f32 %v301, 1.442695
    %v316 = vpow.pop %v315
    %v317 = vmul.f32 %v302, 1.442695
    %v318 = vpow.pop %v317
    %v319 = vadd.f32 %v304, 1.0
    %v320 = vadd.f32 %v306, 1.0
    %v321 = vadd.f32 %v308, 1.0
    %v322 = vadd.f32 %v310, 1.0
    %v323 = vadd.f32 %v312, 1.0
    %v324 = vadd.f32 %v314, 1.0
    %v325 = vadd.f32 %v316, 1.0
    %v326 = vadd.f32 %v318, 1.0
    %v327 = vrcp.pop %v319
    %v328 = vmul.f32 %v319, %v327
    %v329 = vsub.f32 1.0, %v328
    %v330 = vmul.f32 %v327, %v329
    %v331 = vadd.f32 %v327, %v330
    %vm332 = vweird.f32 %v319
    %vm333 = vweird.f32 %v327
    %vm334 = vmor %vm332, %vm333
    %v335 = vsel %vm334, %v327, %v331
    %v336 = vand.u32 2147483647, %v319
    %vm337 = vcmp.eq.f32.partialorder %v336, 8.507059e+37
    %v338 = vand.u32 %v319, 2147483648
    %v339 = vor.u32 1.1754944e-38, %v338
    %v340 = vsel %vm337, %v339, %v335
    %v341 = vmul.f32 1.0, %v340
    %v342 = vrcp.pop %v320
    %v343 = vmul.f32 %v320, %v342
    %v344 = vsub.f32 1.0, %v343
    %v345 = vmul.f32 %v342, %v344
    %v346 = vadd.f32 %v342, %v345
    %vm347 = vweird.f32 %v320
    %vm348 = vweird.f32 %v342
    %vm349 = vmor %vm347, %vm348
    %v350 = vsel %vm349, %v342, %v346
    %v351 = vand.u32 2147483647, %v320
    %vm352 = vcmp.eq.f32.partialorder %v351, 8.507059e+37
    %v353 = vand.u32 %v320, 2147483648
    %v354 = vor.u32 1.1754944e-38, %v353
    %v355 = vsel %vm352, %v354, %v350
    %v356 = vmul.f32 1.0, %v355
    %v357 = vrcp.pop %v321
    %v358 = vmul.f32 %v321, %v357
    %v359 = vsub.f32 1.0, %v358
    %v360 = vmul.f32 %v357, %v359
    %v361 = vadd.f32 %v357, %v360
    %vm362 = vweird.f32 %v321
    %vm363 = vweird.f32 %v357
    %vm364 = vmor %vm362, %vm363
    %v365 = vsel %vm364, %v357, %v361
    %v366 = vand.u32 2147483647, %v321
    %vm367 = vcmp.eq.f32.partialorder %v366, 8.507059e+37
    %v368 = vand.u32 %v321, 2147483648
    %v369 = vor.u32 1.1754944e-38, %v368
    %v370 = vsel %vm367, %v369, %v365
    %v371 = vmul.f32 1.0, %v370
    %v372 = vrcp.pop %v322
    %v373 = vmul.f32 %v322, %v372
    %v374 = vsub.f32 1.0, %v373
    %v375 = vmul.f32 %v372, %v374
    %v376 = vadd.f32 %v372, %v375
    %vm377 = vweird.f32 %v322
    %vm378 = vweird.f32 %v372
    %vm379 = vmor %vm377, %vm378
    %v380 = vsel %vm379, %v372, %v376
    %v381 = vand.u32 2147483647, %v322
    %vm382 = vcmp.eq.f32.partialorder %v381, 8.507059e+37
    %v383 = vand.u32 %v322, 2147483648
    %v384 = vor.u32 1.1754944e-38, %v383
    %v385 = vsel %vm382, %v384, %v380
    %v386 = vmul.f32 1.0, %v385
    %v387 = vrcp.pop %v323
    %v388 = vmul.f32 %v323, %v387
    %v389 = vsub.f32 1.0, %v388
    %v390 = vmul.f32 %v387, %v389
    %v391 = vadd.f32 %v387, %v390
    %vm392 = vweird.f32 %v323
    %vm393 = vweird.f32 %v387
    %vm394 = vmor %vm392, %vm393
    %v395 = vsel %vm394, %v387, %v391
    %v396 = vand.u32 2147483647, %v323
    %vm397 = vcmp.eq.f32.partialorder %v396, 8.507059e+37
    %v398 = vand.u32 %v323, 2147483648
    %v399 = vor.u32 1.1754944e-38, %v398
    %v400 = vsel %vm397, %v399, %v395
    %v401 = vmul.f32 1.0, %v400
    %v402 = vrcp.pop %v324
    %v403 = vmul.f32 %v324, %v402
    %v404 = vsub.f32 1.0, %v403
    %v405 = vmul.f32 %v402, %v404
    %v406 = vadd.f32 %v402, %v405
    %vm407 = vweird.f32 %v324
    %vm408 = vweird.f32 %v402
    %vm409 = vmor %vm407, %vm408
    %v410 = vsel %vm409, %v402, %v406
    %v411 = vand.u32 2147483647, %v324
    %vm412 = vcmp.eq.f32.partialorder %v411, 8.507059e+37
    %v413 = vand.u32 %v324, 2147483648
    %v414 = vor.u32 1.1754944e-38, %v413
    %v415 = vsel %vm412, %v414, %v410
    %v416 = vmul.f32 1.0, %v415
    %v417 = vrcp.pop %v325
    %v418 = vmul.f32 %v325, %v417
    %v419 = vsub.f32 1.0, %v418
    %v420 = vmul.f32 %v417, %v419
    %v421 = vadd.f32 %v417, %v420
    %vm422 = vweird.f32 %v325
    %vm423 = vweird.f32 %v417
    %vm424 = vmor %vm422, %vm423
    %v425 = vsel %vm424, %v417, %v421
    %v426 = vand.u32 2147483647, %v325
    %vm427 = vcmp.eq.f32.partialorder %v426, 8.507059e+37
    %v428 = vand.u32 %v325, 2147483648
    %v429 = vor.u32 1.1754944e-38, %v428
    %v430 = vsel %vm427, %v429, %v425
    %v431 = vmul.f32 1.0, %v430
    %v432 = vrcp.pop %v326
    %v433 = vmul.f32 %v326, %v432
    %v434 = vsub.f32 1.0, %v433
    %v435 = vmul.f32 %v432, %v434
    %v436 = vadd.f32 %v432, %v435
    %vm437 = vweird.f32 %v326
    %vm438 = vweird.f32 %v432
    %vm439 = vmor %vm437, %vm438
    %v440 = vsel %vm439, %v432, %v436
    %v441 = vand.u32 2147483647, %v326
    %vm442 = vcmp.eq.f32.partialorder %v441, 8.507059e+37
    %v443 = vand.u32 %v326, 2147483648
    %v444 = vor.u32 1.1754944e-38, %v443
    %v445 = vsel %vm442, %v444, %v440
    %v446 = vmul.f32 1.0, %v445
    %v447 = vperm.slane %v271, 0
    %v448 = vperm.slane %v272, 0
    %v449 = vperm.slane %v273, 0
    %v450 = vperm.slane %v274, 0
    %v451 = vperm.slane %v275, 0
    %v452 = vperm.slane %v276, 0
    %v453 = vperm.slane %v277, 0
    %v454 = vperm.slane %v278, 0
    %v455 = vmul.f32 %v447, %v341
    %v456 = vmul.f32 %v447, %v356
    %v457 = vmul.f32 %v448, %v341
    %v458 = vmul.f32 %v448, %v356
    %v459 = vmul.f32 %v449, %v341
    %v460 = vmul.f32 %v449, %v356
    %v461 = vmul.f32 %v450, %v341
    %v462 = vmul.f32 %v450, %v356
    %v463 = vmul.f32 %v451, %v341
    %v464 = vmul.f32 %v451, %v356
    %v465 = vmul.f32 %v452, %v341
    %v466 = vmul.f32 %v452, %v356
    %v467 = vmul.f32 %v453, %v341
    %v468 = vmul.f32 %v453, %v356
    %v469 = vmul.f32 %v454, %v341
    %v470 = vmul.f32 %v454, %v356
    %v471 = vperm.slane %v271, 1
    %v472 = vperm.slane %v272, 1
    %v473 = vperm.slane %v273, 1
    %v474 = vperm.slane %v274, 1
    %v475 = vperm.slane %v275, 1
    %v476 = vperm.slane %v276, 1
    %v477 = vperm.slane %v277, 1
    %v478 = vperm.slane %v278, 1
    %v479 = vmul.f32 %v471, %v371
    %v480 = vmul.f32 %v471, %v386
    %v481 = vmul.f32 %v472, %v371
    %v482 = vmul.f32 %v472, %v386
    %v483 = vmul.f32 %v473, %v371
    %v484 = vmul.f32 %v473, %v386
    %v485 = vmul.f32 %v474, %v371
    %v486 = vmul.f32 %v474, %v386
    %v487 = vmul.f32 %v475, %v371
    %v488 = vmul.f32 %v475, %v386
    %v489 = vmul.f32 %v476, %v371
    %v490 = vmul.f32 %v476, %v386
    %v491 = vmul.f32 %v477, %v371
    %v492 = vmul.f32 %v477, %v386
    %v493 = vmul.f32 %v478, %v371
    %v494 = vmul.f32 %v478, %v386
    %v495 = vadd.f32 %v455, %v479
    %v496 = vadd.f32 %v456, %v480
    %v497 = vadd.f32 %v457, %v481
    %v498 = vadd.f32 %v458, %v482
    %v499 = vadd.f32 %v459, %v483
    %v500 = vadd.f32 %v460, %v484
    %v501 = vadd.f32 %v461, %v485
    %v502 = vadd.f32 %v462, %v486
    %v503 = vadd.f32 %v463, %v487
    %v504 = vadd.f32 %v464, %v488
    %v505 = vadd.f32 %v465, %v489
    %v506 = vadd.f32 %v466, %v490
    %v507 = vadd.f32 %v467, %v491
    %v508 = vadd.f32 %v468, %v492
    %v509 = vadd.f32 %v469, %v493
    %v510 = vadd.f32 %v470, %v494
    %v511 = vperm.slane %v271, 2
    %v512 = vperm.slane %v272, 2
    %v513 = vperm.slane %v273, 2
    %v514 = vperm.slane %v274, 2
    %v515 = vperm.slane %v275, 2
    %v516 = vperm.slane %v276, 2
    %v517 = vperm.slane %v277, 2
    %v518 = vperm.slane %v278, 2
    %v519 = vmul.f32 %v511, %v401
    %v520 = vmul.f32 %v511, %v416
    %v521 = vmul.f32 %v512, %v401
    %v522 = vmul.f32 %v512, %v416
    %v523 = vmul.f32 %v513, %v401
    %v524 = vmul.f32 %v513, %v416
    %v525 = vmul.f32 %v514, %v401
    %v526 = vmul.f32 %v514, %v416
    %v527 = vmul.f32 %v515, %v401
    %v528 = vmul.f32 %v515, %v416
    %v529 = vmul.f32 %v516, %v401
    %v530 = vmul.f32 %v516, %v416
    %v531 = vmul.f32 %v517, %v401
    %v532 = vmul.f32 %v517, %v416
    %v533 = vmul.f32 %v518, %v401
    %v534 = vmul.f32 %v518, %v416
    %v535 = vadd.f32 %v495, %v519
    %v536 = vadd.f32 %v496, %v520
    %v537 = vadd.f32 %v497, %v521
    %v538 = vadd.f32 %v498, %v522
    %v539 = vadd.f32 %v499, %v523
    %v540 = vadd.f32 %v500, %v524
    %v541 = vadd.f32 %v501, %v525
    %v542 = vadd.f32 %v502, %v526
    %v543 = vadd.f32 %v503, %v527
    %v544 = vadd.f32 %v504, %v528
    %v545 = vadd.f32 %v505, %v529
    %v546 = vadd.f32 %v506, %v530
    %v547 = vadd.f32 %v507, %v531
    %v548 = vadd.f32 %v508, %v532
    %v549 = vadd.f32 %v509, %v533
    %v550 = vadd.f32 %v510, %v534
    %v551 = vperm.slane %v271, 3
    %v552 = vperm.slane %v272, 3
    %v553 = vperm.slane %v273, 3
    %v554 = vperm.slane %v274, 3
    %v555 = vperm.slane %v275, 3
    %v556 = vperm.slane %v276, 3
    %v557 = vperm.slane %v277, 3
    %v558 = vperm.slane %v278, 3
    %v559 = vmul.f32 %v551, %v431
    %v560 = vmul.f32 %v551, %v446
    %v561 = vmul.f32 %v552, %v431
    %v562 = vmul.f32 %v552, %v446
    %v563 = vmul.f32 %v553, %v431
    %v564 = vmul.f32 %v553, %v446
    %v565 = vmul.f32 %v554, %v431
    %v566 = vmul.f32 %v554, %v446
    %v567 = vmul.f32 %v555, %v431
    %v568 = vmul.f32 %v555, %v446
    %v569 = vmul.f32 %v556, %v431
    %v570 = vmul.f32 %v556, %v446
    %v571 = vmul.f32 %v557, %v431
    %v572 = vmul.f32 %v557, %v446
    %v573 = vmul.f32 %v558, %v431
    %v574 = vmul.f32 %v558, %v446
    %v575 = vadd.f32 %v535, %v559
    %v576 = vadd.f32 %v536, %v560
    %v577 = vadd.f32 %v537, %v561
    %v578 = vadd.f32 %v538, %v562
    %v579 = vadd.f32 %v539, %v563
    %v580 = vadd.f32 %v540, %v564
    %v581 = vadd.f32 %v541, %v565
    %v582 = vadd.f32 %v542, %v566
    %v583 = vadd.f32 %v543, %v567
    %v584 = vadd.f32 %v544, %v568
    %v585 = vadd.f32 %v545, %v569
    %v586 = vadd.f32 %v546, %v570
    %v587 = vadd.f32 %v547, %v571
    %v588 = vadd.f32 %v548, %v572
    %v589 = vadd.f32 %v549, %v573
    %v590 = vadd.f32 %v550, %v574
    %vm591 = vcmask 64512
    %592 = vst.msk [vmem:[%s3] sm:$0xff] %vm591, %v575
    %593 = vst.msk [vmem:[%s3 + $0x8] sm:$0xff] %vm591, %v576
    %594 = vst.msk [vmem:[%s3 + $0x10] sm:$0xff] %vm591, %v577
    %595 = vst.msk [vmem:[%s3 + $0x18] sm:$0xff] %vm591, %v578
    %596 = vst.msk [vmem:[%s3 + $0x20] sm:$0xff] %vm591, %v579
    %597 = vst.msk [vmem:[%s3 + $0x28] sm:$0xff] %vm591, %v580
    %598 = vst.msk [vmem:[%s3 + $0x30] sm:$0xff] %vm591, %v581
    %599 = vst.msk [vmem:[%s3 + $0x38] sm:$0xff] %vm591, %v582
    %600 = vst.msk [vmem:[%s3 + $0x40] sm:$0xff] %vm591, %v583
    %601 = vst.msk [vmem:[%s3 + $0x48] sm:$0xff] %vm591, %v584
    %602 = vst.msk [vmem:[%s3 + $0x50] sm:$0xff] %vm591, %v585
    %603 = vst.msk [vmem:[%s3 + $0x58] sm:$0xff] %vm591, %v586
    %604 = vst.msk [vmem:[%s3 + $0x60] sm:$0xff] %vm591, %v587
    %605 = vst.msk [vmem:[%s3 + $0x68] sm:$0xff] %vm591, %v588
    %606 = vst.msk [vmem:[%s3 + $0x70] sm:$0xff] %vm591, %v589
    %607 = vst.msk [vmem:[%s3 + $0x78] sm:$0xff] %vm591, %v590
    // Predicated region
    $region10: #{aladyn_forward.3} parent=1 // pred_check
      _
    $region11: #{aladyn_forward.3} parent=1 // pred_check_branch
      %609 = sbr.rel (0) target = $region13
    $region12: #{aladyn_forward.3} parent=1 // pred_region
      %611 = vsyncadd [#allocation3], 0
      %s612 = sshll.u32 [#allocation2], 4
      %s613 = int_to_ptr.vmem [resolvable:$true] %s612
      %s614 = sshll.u32 %s2, 4
      %s615 = int_to_ptr.hbm [resolvable:$true] %s614
      %620 = dma.vmem_to_hbm [thread:$0]  %s613, 512, %s615, [#allocation3], 64, 64, 4
    $region13: #{aladyn_forward.3} parent=1 // pred_fallthru
      _
    // Predicated region
    $region14: #{aladyn_forward.3} parent=1 // pred_check
      _
    $region15: #{aladyn_forward.3} parent=1 // pred_check_branch
      %622 = sbr.rel (0) target = $region17
    $region16: #{aladyn_forward.3} parent=1 // pred_region
      _
    $region17: #{aladyn_forward.3} parent=1 // pred_fallthru
      _
    // Predicated region
    $region18: #{aladyn_forward.3} parent=1 // pred_check
      _
    $region19: #{aladyn_forward.3} parent=1 // pred_check_branch
      %624 = sbr.rel (0) target = $region21
    $region20: #{aladyn_forward.3} parent=1 // pred_region
      %626 = dma.done [#allocation3], 512
    $region21: #{aladyn_forward.3} parent=1 // pred_fallthru
      _
    // Predicated region
    $region22: #{aladyn_forward.3} parent=1 // pred_check
      _
    $region23: #{aladyn_forward.3} parent=1 // pred_check_branch
      %628 = sbr.rel (0) target = $region25
    $region24: #{aladyn_forward.3} parent=1 // pred_region
      _
    $region25: #{aladyn_forward.3} parent=1 // pred_fallthru
      _
    %629 = vsyncpa [#allocation3], 1

</llo_original>
